<compile_context>
chip_gen: v5e
topology: v5e:2x2
jax: 0.10.0
libtpu: 0.0.40
codegen_flags: <defaults>
</compile_context>

<pallas_src>
import math
from functools import partial

import jax
import jax.numpy as jnp
from jax.experimental import pallas as pl
from jax.experimental.pallas import tpu as pltpu


_TILE_ELEMS = 1 << 20                  # ~1M elements (~4 MiB f32) per x tile
_VMEM_LIMIT = 48 * 1024 * 1024         # safe on v5e/v6e/v7x


def _round_up(n, m):
    return ((n + m - 1) // m) * m


def _round_down(n, m):
    return max((n // m) * m, m)


def _transposed_tiles(B, D, L):
    """(tB, tL) for (B, D, L) tensors: lane tile multiple of 128, batch blocking
    when D*tL is small, keep >=2 grid steps when possible (2 TCs on v7x)."""
    tL = _round_down(max(_TILE_ELEMS // max(D, 1), 128), 128)
    tL = max(128, min(tL, _round_up(L, 128)))
    tB = max(1, min(B, _TILE_ELEMS // max(D * tL, 1)))
    if pl.cdiv(L, tL) == 1 and B > 1:
        tB = min(tB, max(1, (B + 1) // 2))
    return tB, tL


def _rows_tile(N, row_elems):
    """Rows per grid step: multiple of 8, sized to ~_TILE_ELEMS elements per tile."""
    tN = _round_down(max(_TILE_ELEMS // max(row_elems, 1), 8), 8)
    tN = max(8, min(tN, _round_up(N, 8)))
    if N > 8 and pl.cdiv(N, tN) == 1:
        # split so both v7x TensorCores get work when there is enough of it
        tN = max(8, _round_up(pl.cdiv(N, 2), 8))
    return tN


# --------------------------------------------------------------------------------------
# Kernel 1: TransposedLN, scalar variant.  Reduce over the channel (sublane) axis.
# --------------------------------------------------------------------------------------
def _tln_scalar_kernel(ms_ref, x_ref, o_ref):
    # ms_ref: SMEM (2,) f32 -> [m, s];  x_ref/o_ref: VMEM (tB, D, tL)
    x = x_ref[...].astype(jnp.float32)
    mean = jnp.mean(x, axis=1, keepdims=True)              # sublane reduce (XLU)
    cent = x - mean
    var = jnp.mean(cent * cent, axis=1, keepdims=True)     # population variance
    inv_std = jax.lax.rsqrt(var)                           # EUP; matches s / std
    m = ms_ref[0]
    s = ms_ref[1]
    o_ref[...] = ((s * inv_std) * (cent + m)).astype(o_ref.dtype)


def transposed_ln_scalar(x, m, s):
    """x: (B, D, *spatial); scalar params m, s.  Returns same shape as x."""
    B, D = int(x.shape[0]), int(x.shape[1])
    spatial = x.shape[2:]
    L = int(math.prod(spatial)) if spatial else 1
    x_flat = x.reshape(B, D, L)                             # contiguous, no data movement
    tB, tL = _transposed_tiles(B, D, L)

    ms = jnp.stack([jnp.asarray(m, jnp.float32).reshape(()),
                    jnp.asarray(s, jnp.float32).reshape(())])

    out = pl.pallas_call(
        _tln_scalar_kernel,
        out_shape=jax.ShapeDtypeStruct((B, D, L), x.dtype),
        grid=(pl.cdiv(B, tB), pl.cdiv(L, tL)),
        in_specs=[
            pl.BlockSpec(memory_space=pltpu.MemorySpace.SMEM),       # [m, s] scalars
            pl.BlockSpec((tB, D, tL), lambda b, l: (b, 0, l)),
        ],
        out_specs=pl.BlockSpec((tB, D, tL), lambda b, l: (b, 0, l)),
        compiler_params=pltpu.CompilerParams(
            dimension_semantics=("parallel", "parallel"),
            vmem_limit_bytes=_VMEM_LIMIT),
    )(ms, x_flat)
    return out.reshape(B, D, *spatial)


# --------------------------------------------------------------------------------------
# Kernel 2: TransposedLN non-scalar: LayerNorm over the channel axis D, in place
# (D stays on sublanes; no moveaxis / HBM transpose).
# --------------------------------------------------------------------------------------
def _tln_channel_kernel(x_ref, w_ref, b_ref, o_ref, *, eps):
    # x_ref/o_ref: (tB, D, tL);  w_ref/b_ref: (1, D, 1)
    x = x_ref[...].astype(jnp.float32)
    mean = jnp.mean(x, axis=1, keepdims=True)
    cent = x - mean
    var = jnp.mean(cent * cent, axis=1, keepdims=True)
    inv = jax.lax.rsqrt(var + eps)
    w = w_ref[...].astype(jnp.float32)
    b = b_ref[...].astype(jnp.float32)
    o_ref[...] = (cent * inv * w + b).astype(o_ref.dtype)


def transposed_ln_channel(x, weight, bias, eps=1e-5):
    """x: (B, D, *spatial); weight/bias: (D,). LayerNorm over the channel dim."""
    B, D = int(x.shape[0]), int(x.shape[1])
    spatial = x.shape[2:]
    L = int(math.prod(spatial)) if spatial else 1
    x_flat = x.reshape(B, D, L)
    tB, tL = _transposed_tiles(B, D, L)

    w3 = weight.reshape(1, D, 1)
    b3 = bias.reshape(1, D, 1)

    out = pl.pallas_call(
        partial(_tln_channel_kernel, eps=float(eps)),
        out_shape=jax.ShapeDtypeStruct((B, D, L), x.dtype),
        grid=(pl.cdiv(B, tB), pl.cdiv(L, tL)),
        in_specs=[
            pl.BlockSpec((tB, D, tL), lambda b, l: (b, 0, l)),
            pl.BlockSpec((1, D, 1), lambda b, l: (0, 0, 0)),    # resident weight
            pl.BlockSpec((1, D, 1), lambda b, l: (0, 0, 0)),    # resident bias
        ],
        out_specs=pl.BlockSpec((tB, D, tL), lambda b, l: (b, 0, l)),
        compiler_params=pltpu.CompilerParams(
            dimension_semantics=("parallel", "parallel"),
            vmem_limit_bytes=_VMEM_LIMIT),
    )(x_flat, w3, b3)
    return out.reshape(B, D, *spatial)


# --------------------------------------------------------------------------------------
# Kernel 3: standard LayerNorm over the last dim d (non-transposed 'layer' path).
# --------------------------------------------------------------------------------------
def _ln_kernel(x_ref, w_ref, b_ref, o_ref, *, eps):
    # x_ref/o_ref: (tN, d);  w_ref/b_ref: (1, d)
    x = x_ref[...].astype(jnp.float32)
    mean = jnp.mean(x, axis=-1, keepdims=True)              # lane reduce (XLU)
    cent = x - mean
    var = jnp.mean(cent * cent, axis=-1, keepdims=True)
    inv = jax.lax.rsqrt(var + eps)                          # EUP
    w = w_ref[...].astype(jnp.float32)
    b = b_ref[...].astype(jnp.float32)
    o_ref[...] = (cent * inv * w + b).astype(o_ref.dtype)


def _ln_packed_kernel(x_ref, seg_ref, w_ref, b_ref, o_ref, *, eps, d):
    # Packed layout: each lane row holds k = 128/d logical rows.
    # x_ref/o_ref: (tM, 128); seg_ref: (128, 128) block-diagonal 0/1; w/b: (1, 128).
    x = x_ref[...].astype(jnp.float32)
    seg = seg_ref[...]
    inv_d = 1.0 / float(d)
    mean = jnp.dot(x, seg, precision=jax.lax.Precision.HIGHEST,
                   preferred_element_type=jnp.float32) * inv_d
    cent = x - mean
    var = jnp.dot(cent * cent, seg, precision=jax.lax.Precision.HIGHEST,
                  preferred_element_type=jnp.float32) * inv_d
    inv = jax.lax.rsqrt(var + eps)
    w = w_ref[...]
    b = b_ref[...]
    o_ref[...] = (cent * inv * w + b).astype(o_ref.dtype)


def layer_norm_last(x, weight, bias, eps=1e-5):
    """LayerNorm over the last dim of x.  weight/bias: (d,)."""
    d = int(x.shape[-1])
    lead = x.shape[:-1]
    N = int(math.prod(lead)) if lead else 1
    x2 = x.reshape(N, d)                                    # contiguous, no data movement

    # Small-d path: pack k rows per 128-lane row so loads/stores are lane-dense.
    if d < 128 and 128 % d == 0 and N % (128 // d) == 0:
        k = 128 // d
        N2 = N // k
        xw = x2.reshape(N2, 128)                            # still a no-op reshape
        lane = jnp.arange(128)
        seg = (lane[:, None] // d == lane[None, :] // d).astype(jnp.float32)
        w_t = jnp.tile(weight.astype(jnp.float32), k).reshape(1, 128)
        b_t = jnp.tile(bias.astype(jnp.float32), k).reshape(1, 128)
        tM = _rows_tile(N2, 128)
        out = pl.pallas_call(
            partial(_ln_packed_kernel, eps=float(eps), d=d),
            out_shape=jax.ShapeDtypeStruct((N2, 128), x.dtype),
            grid=(pl.cdiv(N2, tM),),
            in_specs=[
                pl.BlockSpec((tM, 128), lambda i: (i, 0)),
                pl.BlockSpec((128, 128), lambda i: (0, 0)),   # resident segment matrix
                pl.BlockSpec((1, 128), lambda i: (0, 0)),     # resident tiled weight
                pl.BlockSpec((1, 128), lambda i: (0, 0)),     # resident tiled bias
            ],
            out_specs=pl.BlockSpec((tM, 128), lambda i: (i, 0)),
            compiler_params=pltpu.CompilerParams(
                dimension_semantics=("parallel",),
                vmem_limit_bytes=_VMEM_LIMIT),
        )(xw, seg, w_t, b_t)
        return out.reshape(*lead, d)

    # Standard path: one logical row per sublane, d on lanes.
    tN = _rows_tile(N, d)
    w2 = weight.reshape(1, d)
    b2 = bias.reshape(1, d)
    out = pl.pallas_call(
        partial(_ln_kernel, eps=float(eps)),
        out_shape=jax.ShapeDtypeStruct((N, d), x.dtype),
        grid=(pl.cdiv(N, tN),),
        in_specs=[
            pl.BlockSpec((tN, d), lambda i: (i, 0)),
            pl.BlockSpec((1, d), lambda i: (0, 0)),           # resident weight
            pl.BlockSpec((1, d), lambda i: (0, 0)),           # resident bias
        ],
        out_specs=pl.BlockSpec((tN, d), lambda i: (i, 0)),
        compiler_params=pltpu.CompilerParams(
            dimension_semantics=("parallel",),
            vmem_limit_bytes=_VMEM_LIMIT),
    )(x2, w2, b2)
    return out.reshape(*lead, d)


# --------------------------------------------------------------------------------------
# Module wrapper mirroring the PyTorch Normalization forward pass.
# --------------------------------------------------------------------------------------
class Normalization:
    def __init__(self, d, transposed=False, _name_='layer', dtype=jnp.float32, **kwargs):
        self.d = d
        self.transposed = transposed
        self._name_ = _name_
        if _name_ == 'layer':
            self.channel = True
            if transposed:
                self.scalar = kwargs.get('scalar', True)
                if self.scalar:
                    self.m = jnp.zeros((), dtype)           # TransposedLN params
                    self.s = jnp.ones((), dtype)
                else:
                    self.weight = jnp.ones((d,), dtype)     # nn.LayerNorm(d) params
                    self.bias = jnp.zeros((d,), dtype)
                    self.eps = kwargs.get('eps', 1e-5)
            else:
                self.scalar = False
                self.weight = jnp.ones((d,), dtype)
                self.bias = jnp.zeros((d,), dtype)
                self.eps = kwargs.get('eps', 1e-5)
        elif _name_ == 'none':
            self.channel = True
        else:
            # TODO(synk): instance/batch/group norms (running stats, batch-dependent
            # train/eval semantics) have no clean stateless Pallas equivalent here.
            raise NotImplementedError(f"Normalization '{_name_}' not implemented")

    def __call__(self, x):
        if self._name_ == 'none':
            return x
        if self.transposed:
            if self.scalar:
                return transposed_ln_scalar(x, self.m, self.s)
            return transposed_ln_channel(x, self.weight, self.bias, self.eps)
        return layer_norm_last(x, self.weight, self.bias, self.eps)

    def step(self, x, **kwargs):
        assert self._name_ in ['layer', 'none']
        if self.transposed:
            x = x[..., None]
        x = self(x)
        if self.transposed:
            x = x[..., 0]
        return x


if __name__ == "__main__":
    key = jax.random.PRNGKey(0)
    k1, k2, k3, k4, k5, k6 = jax.random.split(key, 6)

    # ---- transposed 'layer' norm (TransposedLN scalar), x: (B, D, H, W) ----
    x_t = jax.random.normal(k1, (2, 4, 16, 16), jnp.float32)
    norm_t = Normalization(4, transposed=True, _name_='layer')
    norm_t.m = jnp.asarray(0.3, jnp.float32)
    norm_t.s = jnp.asarray(1.7, jnp.float32)
    y_t = jax.block_until_ready(norm_t(x_t))

    mean_t = x_t.mean(axis=1, keepdims=True)
    std_t = jnp.sqrt(((x_t - mean_t) ** 2).mean(axis=1, keepdims=True))
    ref_t = norm_t.s / std_t * (x_t - mean_t + norm_t.m)
    assert y_t.shape == x_t.shape
    assert jnp.allclose(y_t, ref_t, atol=1e-4, rtol=1e-4), \
        float(jnp.max(jnp.abs(y_t - ref_t)))

    # ---- non-transposed 'layer' norm, small d=32 (packed lane-dense path) ----
    d = 32
    x_l = jax.random.normal(k2, (2, 16, d), jnp.float32)
    norm_l = Normalization(d, transposed=False, _name_='layer')
    norm_l.weight = 1.0 + 0.1 * jax.random.normal(k3, (d,), jnp.float32)
    norm_l.bias = jnp.linspace(-0.5, 0.5, d, dtype=jnp.float32)
    y_l = jax.block_until_ready(norm_l(x_l))

    mu = x_l.mean(-1, keepdims=True)
    var = ((x_l - mu) ** 2).mean(-1, keepdims=True)
    ref_l = (x_l - mu) * jax.lax.rsqrt(var + 1e-5) * norm_l.weight + norm_l.bias
    assert y_l.shape == x_l.shape
    assert jnp.allclose(y_l, ref_l, atol=1e-4, rtol=1e-4), \
        float(jnp.max(jnp.abs(y_l - ref_l)))

    # ---- non-transposed 'layer' norm, d=128 (standard path) ----
    d2 = 128
    x_m = jax.random.normal(k4, (2, 8, d2), jnp.float32)
    norm_m = Normalization(d2, transposed=False, _name_='layer')
    norm_m.weight = 1.0 + 0.05 * jax.random.normal(k5, (d2,), jnp.float32)
    norm_m.bias = jnp.linspace(-0.2, 0.2, d2, dtype=jnp.float32)
    y_m = jax.block_until_ready(norm_m(x_m))

    mu2 = x_m.mean(-1, keepdims=True)
    var2 = ((x_m - mu2) ** 2).mean(-1, keepdims=True)
    ref_m = (x_m - mu2) * jax.lax.rsqrt(var2 + 1e-5) * norm_m.weight + norm_m.bias
    assert jnp.allclose(y_m, ref_m, atol=1e-4, rtol=1e-4), \
        float(jnp.max(jnp.abs(y_m - ref_m)))

    # ---- transposed 'layer' norm, non-scalar (LayerNorm over D, no transposes) ----
    x_c = jax.random.normal(k6, (2, 4, 32), jnp.float32)
    norm_c = Normalization(4, transposed=True, _name_='layer', scalar=False)
    norm_c.weight = jnp.asarray([1.1, 0.9, 1.3, 0.7], jnp.float32)
    norm_c.bias = jnp.asarray([0.1, -0.2, 0.05, 0.3], jnp.float32)
    y_c = jax.block_until_ready(norm_c(x_c))

    mu_c = x_c.mean(axis=1, keepdims=True)
    var_c = ((x_c - mu_c) ** 2).mean(axis=1, keepdims=True)
    ref_c = ((x_c - mu_c) * jax.lax.rsqrt(var_c + 1e-5)
             * norm_c.weight[None, :, None] + norm_c.bias[None, :, None])
    assert jnp.allclose(y_c, ref_c, atol=1e-4, rtol=1e-4), \
        float(jnp.max(jnp.abs(y_c - ref_c)))

    print("KERNEL_OK")
</pallas_src>

<mosaic_0001>
module attributes {stable_mosaic.version = 11 : i64} {
  func.func @_tln_scalar_kernel(%arg0: i32, %arg1: i32, %arg2: memref<2xf32, #tpu.memory_space<smem>>, %arg3: memref<1x4x256xf32, #tpu.memory_space<vmem>>, %arg4: memref<1x4x256xf32, #tpu.memory_space<vmem>>) attributes {dimension_semantics = [#tpu.dimension_semantics<parallel>, #tpu.dimension_semantics<parallel>], iteration_bounds = array<i64: 2, 1>, scalar_prefetch = 0 : i64, scratch_operands = 0 : i64, tpu.core_type = #tpu.core_type<tc>, window_params = [{transform_indices = @transform_0, window_bounds = array<i64: 2>}, {transform_indices = @transform_1, window_bounds = array<i64: 1, 4, 256>}, {transform_indices = @transform_2, window_bounds = array<i64: 1, 4, 256>}]} {
    %c0 = arith.constant 0 : index
    %c0_0 = arith.constant 0 : index
    %c0_1 = arith.constant 0 : index
    %0 = vector.load %arg3[%c0, %c0_0, %c0_1] : memref<1x4x256xf32, #tpu.memory_space<vmem>>, vector<1x4x256xf32>
    %cst = arith.constant dense<0.000000e+00> : vector<1x256xf32>
    %1 = vector.multi_reduction <add>, %0, %cst [1] : vector<1x4x256xf32> to vector<1x256xf32>
    %2 = vector.shape_cast %1 : vector<1x256xf32> to vector<1x1x256xf32>
    %cst_2 = arith.constant 4.000000e+00 : f32
    %3 = vector.broadcast %cst_2 : f32 to vector<1x1x256xf32>
    %4 = arith.divf %2, %3 : vector<1x1x256xf32>
    %5 = vector.broadcast %4 : vector<1x1x256xf32> to vector<1x4x256xf32>
    %6 = arith.subf %0, %5 : vector<1x4x256xf32>
    %7 = arith.mulf %6, %6 : vector<1x4x256xf32>
    %cst_3 = arith.constant dense<0.000000e+00> : vector<1x256xf32>
    %8 = vector.multi_reduction <add>, %7, %cst_3 [1] : vector<1x4x256xf32> to vector<1x256xf32>
    %9 = vector.shape_cast %8 : vector<1x256xf32> to vector<1x1x256xf32>
    %cst_4 = arith.constant 4.000000e+00 : f32
    %10 = vector.broadcast %cst_4 : f32 to vector<1x1x256xf32>
    %11 = arith.divf %9, %10 : vector<1x1x256xf32>
    %12 = math.rsqrt %11 : vector<1x1x256xf32>
    %c0_5 = arith.constant 0 : index
    %13 = memref.load %arg2[%c0_5] : memref<2xf32, #tpu.memory_space<smem>>
    %c1 = arith.constant 1 : index
    %14 = memref.load %arg2[%c1] : memref<2xf32, #tpu.memory_space<smem>>
    %15 = vector.broadcast %14 : f32 to vector<1x1x256xf32>
    %16 = arith.mulf %15, %12 : vector<1x1x256xf32>
    %17 = vector.broadcast %13 : f32 to vector<1x4x256xf32>
    %18 = arith.addf %6, %17 : vector<1x4x256xf32>
    %19 = vector.broadcast %16 : vector<1x1x256xf32> to vector<1x4x256xf32>
    %20 = arith.mulf %19, %18 : vector<1x4x256xf32>
    %c0_6 = arith.constant 0 : index
    %c0_7 = arith.constant 0 : index
    %c0_8 = arith.constant 0 : index
    %21 = vector.load %arg4[%c0_6, %c0_7, %c0_8] : memref<1x4x256xf32, #tpu.memory_space<vmem>>, vector<1x4x256xf32>
    tpu.vector_store %arg4[%c0_6, %c0_7, %c0_8], %20 {strides = array<i32>} : memref<1x4x256xf32, #tpu.memory_space<vmem>>, vector<1x4x256xf32>,
    return
  }
  func.func @transform_0(%arg0: i32, %arg1: i32) -> i32 {
    %c0_i32 = arith.constant 0 : i32
    %c0_i32_0 = arith.constant 0 : i32
    return %c0_i32 : i32
  }
  func.func @transform_1(%arg0: i32, %arg1: i32) -> (i32, i32, i32) {
    %c0_i32 = arith.constant 0 : i32
    %c0_i32_0 = arith.constant 0 : i32
    return %arg0, %c0_i32, %arg1 : i32, i32, i32
  }
  func.func @transform_2(%arg0: i32, %arg1: i32) -> (i32, i32, i32) {
    %c0_i32 = arith.constant 0 : i32
    %c0_i32_0 = arith.constant 0 : i32
    return %arg0, %c0_i32, %arg1 : i32, i32, i32
  }
}

</mosaic_0001>

<llo_original>
// kernel: tpu_custom_call.1
$region0: #{tpu_custom_call.1}
  #allocation0 [shape = 'u32[]', space=smem, size = 0x4, offset = 0x4, fixed_abs, tag = 'smem constant byte address 0x4 - core index']
  #allocation1 [shape = 'u32[72,128]{1,0:T(1,128)}', space=vmem, size = 0x9000, scoped, tag = 'internal scratch']
  %s0 = inlined_call_operand.hbm [shape: f32[2], index: 0, kind: input, shape index: {}]
  %s1 = inlined_call_operand.hbm [shape: f32[2,4,256], index: 1, kind: input, shape index: {}]
  %s2 = inlined_call_operand.hbm [shape: f32[2,4,256], index: 2, kind: output, shape index: {}]
  %s3 = sld [smem:[#allocation0]]
  $region49: #{tpu_custom_call.1} parent=0
    _
  %s5 = ssub.s32 1, %s3
  %s6 = scalar_select 0, %s5, %s3
  $region1: #{tpu_custom_call.1} parent=0
    #allocation2 [shape = 'u8[512]{0}', space=smem, size = 0x200, scoped, tag = 'input window, operand 0, single buffered']
    #allocation3 [shape = 's32[2]{0}', space=sflag, size = 0x8, scoped, tag = 'scoped memory for tpu_custom_call.1']
    #allocation4 [shape = 's32[2]{0}', space=sflag, size = 0x8, scoped, tag = 'scoped memory for tpu_custom_call.1']
    #allocation5 [shape = 's32[2]{0}', space=sflag, size = 0x8, scoped, tag = 'scoped memory for tpu_custom_call.1']
    #allocation6 [shape = 'u8[8192]{0}', space=vmem, size = 0x2000, scoped, tag = 'input window, operand 1']
    #allocation7 [shape = 'u8[8192]{0}', space=vmem, size = 0x2000, scoped, tag = 'output window, operand 0']
    %7 = vsyncpa [#allocation5], 0
    %8 = vsyncpa [#allocation3], 0
    %s9 = scalar_lea.sflag [#allocation3], 1
    %10 = vsyncpa %s9, 0
    %11 = vsyncpa [#allocation4], 0
    %s12 = scalar_lea.sflag [#allocation4], 1
    %13 = vsyncpa %s12, 0
    loop: start=0, step=1, limit=4
    $region2: #{tpu_custom_call.1} parent=1 // loop_pre_header
      _
    $region3: #{tpu_custom_call.1} parent=1 // loop_header
      %s15 = sphi 0, %s19
      %p16 = scmp.ge.s32.totalorder %s15, 4
      %s22 = sphi 0, %s34
      %s23 = sphi 0, %s30
      %s24 = sphi 0, %s22
      %s25 = sphi 0, %s23
      %s26 = sphi 0, %s24
      %s27 = sphi 0, %s25
      %s35 = sphi 0, %s35
      %s37 = sphi 0, %s35
      %s38 = sphi 0, %s37
      %s52 = sphi 0, %s38
      %s60 = sphi 0, %s62
      %s63 = sphi 0, %s60
      %s64 = sphi 0, %s63
      %s80 = sphi 0, %s64
      %s88 = sphi 0, %s90
      %s91 = sphi 0, %s88
      %s92 = sphi 0, %s91
      %s108 = sphi 0, %s92
    $region4: #{tpu_custom_call.1} parent=1 // loop_header_branch
      %18 = sbr.rel (%p16) target = $region8
    $region5: #{tpu_custom_call.1} parent=1 // loop_body
      %s20 = ssub.s32 %s15, 1
      %s21 = ssub.s32 %s15, 2
      %s28 = sadd.s32 1, %s23
      %p29 = scmp.ge.s32.totalorder %s28, 1
      %s30 = scalar_select %p29, 0, %s28
      %s31 = sadd.s32 1, %s22
      %s32 = scalar_select %p29, %s31, %s22
      %p33 = scmp.ge.s32.totalorder %s32, 2
      %s34 = scalar_select %p33, 0, %s32
      %s36 = sadd.s32 %s35, 1
      %p39 = scmp.eq.s32.totalorder %s15, 1
      %p40 = scmp.ne.s32.totalorder %s35, %s37
      %p41 = scmp.eq.s32.totalorder %s15, 0
      %p42 = por %p40, %p41
      %p43 = scmp.ne.s32.totalorder %s35, %s37
      %p44 = scmp.eq.s32.totalorder %s20, 1
      %p45 = por %p43, %p44
      %p46 = scmp.ne.s32.totalorder %s37, %s38
      %p47 = scmp.eq.s32.totalorder %s20, 0
      %p48 = por %p46, %p47
      %p49 = scmp.ne.s32.totalorder %s37, %s38
      %p50 = scmp.eq.s32.totalorder %s21, 1
      %p51 = por %p49, %p50
      %p53 = scmp.ne.s32.totalorder %s38, %s52
      %p54 = scmp.eq.s32.totalorder %s21, 0
      %p55 = por %p53, %p54
      %s56 = ssub.s32 %s22, %s34
      %s57 = ssub.s32 %s23, %s30
      %s58 = sor.u32 %s56, %s57
      %p59 = scmp.eq.s32.totalorder %s58, 0
      %s61 = sadd.s32 %s60, 1
      %s62 = scalar_select %p59, %s60, %s61
      %p65 = pneg %p59
      %p66 = scmp.eq.s32.totalorder %s15, 1
      %p67 = por %p65, %p66
      %p68 = scmp.ne.s32.totalorder %s60, %s63
      %p69 = scmp.eq.s32.totalorder %s15, 0
      %p70 = por %p68, %p69
      %p71 = scmp.ne.s32.totalorder %s60, %s63
      %p72 = scmp.eq.s32.totalorder %s20, 1
      %p73 = por %p71, %p72
      %p74 = scmp.ne.s32.totalorder %s63, %s64
      %p75 = scmp.eq.s32.totalorder %s20, 0
      %p76 = por %p74, %p75
      %p77 = scmp.ne.s32.totalorder %s63, %s64
      %p78 = scmp.eq.s32.totalorder %s21, 1
      %p79 = por %p77, %p78
      %p81 = scmp.ne.s32.totalorder %s64, %s80
      %p82 = scmp.eq.s32.totalorder %s21, 0
      %p83 = por %p81, %p82
      %s84 = ssub.s32 %s22, %s34
      %s85 = ssub.s32 %s23, %s30
      %s86 = sor.u32 %s84, %s85
      %p87 = scmp.eq.s32.totalorder %s86, 0
      %s89 = sadd.s32 %s88, 1
      %s90 = scalar_select %p87, %s88, %s89
      %p93 = pneg %p87
      %p94 = scmp.eq.s32.totalorder %s15, 1
      %p95 = por %p93, %p94
      %p96 = scmp.ne.s32.totalorder %s88, %s91
      %p97 = scmp.eq.s32.totalorder %s15, 0
      %p98 = por %p96, %p97
      %p99 = scmp.ne.s32.totalorder %s88, %s91
      %p100 = scmp.eq.s32.totalorder %s20, 1
      %p101 = por %p99, %p100
      %p102 = scmp.ne.s32.totalorder %s91, %s92
      %p103 = scmp.eq.s32.totalorder %s20, 0
      %p104 = por %p102, %p103
      %p105 = scmp.ne.s32.totalorder %s91, %s92
      %p106 = scmp.eq.s32.totalorder %s21, 1
      %p107 = por %p105, %p106
      %p109 = scmp.ne.s32.totalorder %s92, %s108
      %p110 = scmp.eq.s32.totalorder %s21, 0
      %p111 = por %p109, %p110
      %p112 = scmp.le.s32.totalorder 1, %s15
      %p113 = scmp.lt.s32.totalorder %s15, 3
      %p114 = pnand %p112, %p113
      %p115 = pneg %p114
      // Predicated region
      $region9: #{tpu_custom_call.1} parent=5 // pred_check
        _
      $region10: #{tpu_custom_call.1} parent=5 // pred_check_branch
        %117 = sbr.rel (%p114) target = $region12
      $region11: #{tpu_custom_call.1} parent=5 // pred_region
        %s118 = ssub.s32 %s15, 1
        // Predicated region
        $region13: #{tpu_custom_call.1} parent=11 // pred_check
          %p119 = pneg %p48
        $region14: #{tpu_custom_call.1} parent=11 // pred_check_branch
          %121 = sbr.rel (%p119) target = $region16
        $region15: #{tpu_custom_call.1} parent=11 // pred_region
          %123 = vsyncadd [#allocation5], 0
          %s125 = sshll.u32 %s0, 4
          %s126 = int_to_ptr.hbm [resolvable:$true] %s125
          %128 = dma.hbm_to_smem %s126, 16, [#allocation2], [#allocation5]
        $region16: #{tpu_custom_call.1} parent=11 // pred_fallthru
          _
      $region12: #{tpu_custom_call.1} parent=5 // pred_fallthru
        _
      %p129 = scmp.lt.s32.totalorder %s15, 2
      // Predicated region
      $region17: #{tpu_custom_call.1} parent=5 // pred_check
        %p130 = pneg %p129
      $region18: #{tpu_custom_call.1} parent=5 // pred_check_branch
        %132 = sbr.rel (%p130) target = $region20
      $region19: #{tpu_custom_call.1} parent=5 // pred_region
        // Predicated region
        $region21: #{tpu_custom_call.1} parent=19 // pred_check
          %p133 = pneg %p70
        $region22: #{tpu_custom_call.1} parent=19 // pred_check_branch
          %135 = sbr.rel (%p133) target = $region24
        $region23: #{tpu_custom_call.1} parent=19 // pred_region
          %s136 = sand.u32 %s60, 1
          %s137 = scalar_lea.sflag [#allocation3], %s136
          %s138 = sand.u32 %s60, 1
          %s139 = smul.addr %s138, 8
          %s140 = scalar_lea.vmem [#allocation6], %s139
          %s141 = smul.u32 2, %s23
          %143 = vsyncadd %s137, 0
          %s144 = smul.addr %s22, 2
          %s145 = sadd.s32 %s141, %s144
          %s146 = smul.addr %s145, 4
          %s147 = scalar_lea.hbm %s1, %s146
          %s149 = sshll.u32 %s147, 4
          %s150 = int_to_ptr.hbm [resolvable:$true] %s149
          %s151 = sshll.u32 %s140, 4
          %s152 = int_to_ptr.vmem [resolvable:$true] %s151
          %154 = dma.hbm_to_vmem [thread:$0]  %s150, 128, %s152, %s137
        $region24: #{tpu_custom_call.1} parent=19 // pred_fallthru
          _
      $region20: #{tpu_custom_call.1} parent=5 // pred_fallthru
        _
      %p155 = scmp.le.s32.totalorder 1, %s15
      %p156 = scmp.lt.s32.totalorder %s15, 3
      %p157 = pnand %p155, %p156
      %p158 = pneg %p157
      // Predicated region
      $region25: #{tpu_custom_call.1} parent=5 // pred_check
        _
      $region26: #{tpu_custom_call.1} parent=5 // pred_check_branch
        %160 = sbr.rel (%p157) target = $region28
      $region27: #{tpu_custom_call.1} parent=5 // pred_region
        %s161 = ssub.s32 %s15, 1
        // Predicated region
        $region29: #{tpu_custom_call.1} parent=27 // pred_check
          %p162 = pneg %p48
        $region30: #{tpu_custom_call.1} parent=27 // pred_check_branch
          %164 = sbr.rel (%p162) target = $region32
        $region31: #{tpu_custom_call.1} parent=27 // pred_region
          %166 = dma.done [#allocation5], 16
        $region32: #{tpu_custom_call.1} parent=27 // pred_fallthru
          _
        %s167 = sand.u32 %s63, 1
        %s168 = scalar_lea.sflag [#allocation3], %s167
        %s169 = sand.u32 %s63, 1
        %s170 = smul.addr %s169, 8
        %s171 = scalar_lea.vmem [#allocation6], %s170
        // Predicated region
        $region33: #{tpu_custom_call.1} parent=27 // pred_check
          %p172 = pneg %p76
        $region34: #{tpu_custom_call.1} parent=27 // pred_check_branch
          %174 = sbr.rel (%p172) target = $region36
        $region35: #{tpu_custom_call.1} parent=27 // pred_region
          %176 = dma.done %s168, 128
        $region36: #{tpu_custom_call.1} parent=27 // pred_fallthru
          _
        %177 = sfence
        %p178 = pneg %p48
        %p179 = pneg %p45
        %s180 = sand.u32 %s63, 1
        %s181 = scalar_lea.sflag [#allocation3], %s180
        %s182 = sand.u32 %s63, 1
        %s183 = smul.addr %s182, 8
        %s184 = scalar_lea.vmem [#allocation6], %s183
        %p185 = pneg %p76
        %p186 = pneg %p73
        %p187 = pneg %p104
        %p188 = pneg %p101
        %s189 = sand.u32 %s91, 1
        %s190 = scalar_lea.sflag [#allocation4], %s189
        %s191 = sand.u32 %s91, 1
        %s192 = smul.addr %s191, 8
        %s193 = scalar_lea.vmem [#allocation7], %s192
        %s194 = smul.u32 2, %s25
        %s195 = smul.u32 2, %s25
        %v196 = vld [vmem:[%s171] sm:$0xff]
        %198 = vst [vmem:[#allocation1] ss:$2 sm:$0xff] %v196
        %v199 = vld.sshfl [vmem:[#allocation1] sm:$0xff pattern:$0x75316420]
        %v200 = vld.sshfl [vmem:[#allocation1 + $0x8] sm:$0xff pattern:$0x75316420]
        %vm203 = vcmask 1043456
        %v204 = vsel %vm203, %v199, 0.0
        %v205 = vrot.slane %v204, 4
        %v206 = vadd.f32 %v204, %v205
        %v207 = vrot.slane %v206, 2
        %v208 = vadd.f32 %v206, %v207
        %v209 = vrot.slane %v208, 1
        %v210 = vadd.f32 %v208, %v209
        %v211 = vsel %vm203, %v200, 0.0
        %v212 = vrot.slane %v211, 4
        %v213 = vadd.f32 %v211, %v212
        %v214 = vrot.slane %v213, 2
        %v215 = vadd.f32 %v213, %v214
        %v216 = vrot.slane %v215, 1
        %v217 = vadd.f32 %v215, %v216
        %v218 = vrcp.pop 4.0
        %v219 = vmul.f32 4.0, %v218
        %v220 = vsub.f32 1.0, %v219
        %v221 = vmul.f32 %v218, %v220
        %v222 = vadd.f32 %v218, %v221
        %vm223 = vweird.f32 %v218
        %v224 = vsel %vm223, %v218, %v222
        %v225 = vmul.f32 %v210, %v224
        %v226 = vmul.f32 %v217, %v224
        %v229 = vrot.slane %v226, 4
        %v230 = vsel %vm203, %v225, %v229
        %v232 = vsub.f32 %v196, %v230
        %v233 = vmul.f32 %v232, %v232
        %235 = vst [vmem:[#allocation1] ss:$2 sm:$0xff] %v233
        %v236 = vld.sshfl [vmem:[#allocation1] sm:$0xff pattern:$0x75316420]
        %v237 = vld.sshfl [vmem:[#allocation1 + $0x8] sm:$0xff pattern:$0x75316420]
        %v240 = vsel %vm203, %v236, 0.0
        %v241 = vrot.slane %v240, 4
        %v242 = vadd.f32 %v240, %v241
        %v243 = vrot.slane %v242, 2
        %v244 = vadd.f32 %v242, %v243
        %v245 = vrot.slane %v244, 1
        %v246 = vadd.f32 %v244, %v245
        %v247 = vsel %vm203, %v237, 0.0
        %v248 = vrot.slane %v247, 4
        %v249 = vadd.f32 %v247, %v248
        %v250 = vrot.slane %v249, 2
        %v251 = vadd.f32 %v249, %v250
        %v252 = vrot.slane %v251, 1
        %v253 = vadd.f32 %v251, %v252
        %v254 = vmul.f32 %v246, %v224
        %v255 = vmul.f32 %v253, %v224
        %v256 = vrsqrt.pop %v254
        %v257 = vmul.f32 %v256, %v254
        %v258 = vmul.f32 %v257, %v256
        %v259 = vmul.f32 0.5, %v258
        %v260 = vsub.f32 1.5, %v259
        %v261 = vmul.f32 %v256, %v260
        %vm262 = vweird.f32 %v254
        %vm263 = vweird.f32 %v256
        %vm264 = vmor %vm262, %vm263
        %v265 = vsel %vm264, %v256, %v261
        %v266 = vrsqrt.pop %v255
        %v267 = vmul.f32 %v266, %v255
        %v268 = vmul.f32 %v267, %v266
        %v269 = vmul.f32 0.5, %v268
        %v270 = vsub.f32 1.5, %v269
        %v271 = vmul.f32 %v266, %v270
        %vm272 = vweird.f32 %v255
        %vm273 = vweird.f32 %v266
        %vm274 = vmor %vm272, %vm273
        %v275 = vsel %vm274, %v266, %v271
        %s276 = sld [smem:[#allocation2]]
        %s277 = sld [smem:[#allocation2 + $0x1]]
        %v278 = vstv %s277
        %v279 = vmul.f32 %v278, %v265
        %v280 = vmul.f32 %v278, %v275
        %v281 = vstv %s276
        %v282 = vadd.f32 %v232, %v281
        %284 = vst [vmem:[#allocation1] ss:$2 sm:$0xff] %v282
        %v285 = vld.sshfl [vmem:[#allocation1] sm:$0xff pattern:$0x75316420]
        %v286 = vld.sshfl [vmem:[#allocation1 + $0x8] sm:$0xff pattern:$0x75316420]
        %v289 = vmul.f32 %v279, %v285
        %v290 = vmul.f32 %v280, %v286
        %v293 = vrot.slane %v290, 4
        %v294 = vsel %vm203, %v289, %v293
        %296 = vst [vmem:[%s193] sm:$0xff] %v294
        %s297 = sand.u32 %s91, 1
        %s298 = scalar_lea.sflag [#allocation4], %s297
        %s299 = sand.u32 %s91, 1
        %s300 = smul.addr %s299, 8
        %s301 = scalar_lea.vmem [#allocation7], %s300
        // Predicated region
        $region37: #{tpu_custom_call.1} parent=27 // pred_check
          %p302 = pneg %p101
        $region38: #{tpu_custom_call.1} parent=27 // pred_check_branch
          %304 = sbr.rel (%p302) target = $region40
        $region39: #{tpu_custom_call.1} parent=27 // pred_region
          %s305 = smul.u32 2, %s25
          %307 = vsyncadd %s298, 0
          %s308 = smul.addr %s24, 2
          %s309 = sadd.s32 %s305, %s308
          %s310 = smul.addr %s309, 4
          %s311 = scalar_lea.hbm %s2, %s310
          %s313 = sshll.u32 %s301, 4
          %s314 = int_to_ptr.vmem [resolvable:$true] %s313
          %s315 = sshll.u32 %s311, 4
          %s316 = int_to_ptr.hbm [resolvable:$true] %s315
          %318 = dma.vmem_to_hbm [thread:$0]  %s314, 128, %s316, %s298
        $region40: #{tpu_custom_call.1} parent=27 // pred_fallthru
          _
      $region28: #{tpu_custom_call.1} parent=5 // pred_fallthru
        _
      %p319 = scmp.le.s32.totalorder 2, %s15
      // Predicated region
      $region41: #{tpu_custom_call.1} parent=5 // pred_check
        %p320 = pneg %p319
      $region42: #{tpu_custom_call.1} parent=5 // pred_check_branch
        %322 = sbr.rel (%p320) target = $region44
      $region43: #{tpu_custom_call.1} parent=5 // pred_region
        %s323 = ssub.s32 %s15, 2
        // Predicated region
        $region45: #{tpu_custom_call.1} parent=43 // pred_check
          %p324 = pneg %p107
        $region46: #{tpu_custom_call.1} parent=43 // pred_check_branch
          %326 = sbr.rel (%p324) target = $region48
        $region47: #{tpu_custom_call.1} parent=43 // pred_region
          %s327 = sand.u32 %s92, 1
          %s328 = scalar_lea.sflag [#allocation4], %s327
          %s329 = sand.u32 %s92, 1
          %s330 = smul.addr %s329, 8
          %s331 = scalar_lea.vmem [#allocation7], %s330
          %333 = dma.done %s328, 128
        $region48: #{tpu_custom_call.1} parent=43 // pred_fallthru
          _
      $region44: #{tpu_custom_call.1} parent=5 // pred_fallthru
        _
    $region6: #{tpu_custom_call.1} parent=1 // loop_footer
      %s19 = sadd.s32 1, %s15
    $region7: #{tpu_custom_call.1} parent=1 // loop_footer_branch
      %14 = sbr.rel target = $region3
    $region8: #{tpu_custom_call.1} parent=1 // loop_exit
      _
    %334 = vsyncpa [#allocation3], 1
    %s335 = scalar_lea.sflag [#allocation3], 1
    %336 = vsyncpa %s335, 1
    %337 = vsyncpa [#allocation4], 1
    %s338 = scalar_lea.sflag [#allocation4], 1
    %339 = vsyncpa %s338, 1
    %340 = vsyncpa [#allocation5], 1
    %s341 = scalar_lea.sflag [#allocation5], 1
    %342 = vsyncpa %s341, 1

</llo_original>
